<compile_context>
chip_gen: v5e
topology: v5e:2x2
jax: 0.10.0
libtpu: 0.0.40
codegen_flags: <defaults>
</compile_context>

<pallas_src>
import math

import jax
import jax.numpy as jnp
from jax.experimental import pallas as pl
from jax.experimental.pallas import tpu as pltpu


def _round_up(n, m):
    return ((n + m - 1) // m) * m


def _pick_batch_tile(batch, *, min_grid=2, max_tile=2048):
    """8-aligned, VMEM-bounded batch tile; >=min_grid tiles for large batches
    so the two v7x TensorCores both get work (dimension_semantics parallel)."""
    if batch <= 8:
        return 8
    tb = _round_up(-(-batch // min_grid), 8)      # ceil(batch / min_grid), 8-aligned
    return max(8, min(max_tile, tb))


def _make_mlp_kernel(num_layers, mxu_dtype=None):
    """Fused MLP kernel.  Ref order:
    e1, e2, w1a, w1b, b1, (w_i, b_i) for layers 1..L-1, o_ref."""

    def _c(x):  # cast only MXU *activation* operands; weights pre-cast at prep time
        return x if mxu_dtype is None else x.astype(mxu_dtype)

    def kernel(*refs):
        o_ref = refs[-1]
        e1 = refs[0][...]
        e2 = refs[1][...]
        wa = refs[2][...]
        wb = refs[3][...]
        b0 = refs[4][...]

        # Layer 0: split-weight trick replaces torch.cat([e1, e2], -1).
        h = (jnp.dot(_c(e1), wa, preferred_element_type=jnp.float32)
             + jnp.dot(_c(e2), wb, preferred_element_type=jnp.float32)
             + b0)

        idx = 5
        for _ in range(1, num_layers):
            # ReLU after the previous hidden layer; Dropout(0.1) = identity (eval).
            h = jnp.maximum(h, 0.0)
            w = refs[idx][...]
            bl = refs[idx + 1][...]
            idx += 2
            h = jnp.dot(_c(h), w, preferred_element_type=jnp.float32) + bl

        # Output activation: Tanh -> * pi, written at true width.
        o_ref[...] = (jnp.tanh(h) * jnp.float32(math.pi)).astype(o_ref.dtype)

    return kernel


def init_raw_params(key, embedding_dim, quantum_param_count, hidden_dims):
    """Deterministic init mirroring nn.Linear shapes (weights transposed)."""
    dims = [embedding_dim * 2] + list(hidden_dims) + [quantum_param_count]
    params = []
    for i in range(len(dims) - 1):
        fan_in, fan_out = dims[i], dims[i + 1]
        key, kw, kb = jax.random.split(key, 3)
        bound = 1.0 / math.sqrt(fan_in)
        w = jax.random.uniform(kw, (fan_in, fan_out), jnp.float32, -bound, bound)
        b = jax.random.uniform(kb, (1, fan_out), jnp.float32, -bound, bound)
        params.append((w, b))
    return params


def prepare_params(raw_params, embedding_dim, *, mxu_dtype=None):
    """One-time static prep:
      * split layer-0 weight at E (concat elimination),
      * zero-pad hidden out dims / contraction dims to 128 lanes (MXU-friendly;
        ReLU(0)=0 keeps math exact),
      * keep the FINAL layer's out dim at its true width (narrow output store),
      * optionally pre-cast weights (not biases) to mxu_dtype (e.g. bf16)."""
    E = embedding_dim
    n = len(raw_params)
    prepared = []
    for li, (w, b) in enumerate(raw_params):
        fan_in, fan_out = w.shape
        last = (li == n - 1)
        out_p = fan_out if last else _round_up(fan_out, 128)
        if li == 0:
            wa = jnp.pad(w[:E], ((0, 0), (0, out_p - fan_out)))
            wb = jnp.pad(w[E:], ((0, 0), (0, out_p - fan_out)))
            if mxu_dtype is not None:
                wa, wb = wa.astype(mxu_dtype), wb.astype(mxu_dtype)
            prepared += [wa, wb]
        else:
            in_p = _round_up(fan_in, 128)
            wp = jnp.pad(w, ((0, in_p - fan_in), (0, out_p - fan_out)))
            if mxu_dtype is not None:
                wp = wp.astype(mxu_dtype)
            prepared.append(wp)
        prepared.append(jnp.pad(b, ((0, 0), (0, out_p - fan_out))))
    return tuple(prepared)


def classical_mlp_forward(embedding1, embedding2, prepared_params,
                          quantum_param_count, *, mxu_dtype=None,
                          out_dtype=jnp.float32):
    """Fused MLP forward: one pallas_call, batch-tiled parallel grid,
    resident weights, true-width output."""
    B, E = embedding1.shape
    P = quantum_param_count
    num_layers = (len(prepared_params) - 1) // 2
    assert prepared_params[-1].shape[-1] == P

    TB = _pick_batch_tile(B)
    Bp = _round_up(B, TB)
    if Bp != B:  # pad batch so every grid step sees a full tile
        embedding1 = jnp.pad(embedding1, ((0, Bp - B), (0, 0)))
        embedding2 = jnp.pad(embedding2, ((0, Bp - B), (0, 0)))
    grid_b = Bp // TB

    kernel = _make_mlp_kernel(num_layers, mxu_dtype)

    act_spec = pl.BlockSpec((TB, E), lambda i: (i, 0))
    in_specs = [act_spec, act_spec] + [
        pl.BlockSpec(p.shape, lambda i: (0, 0))      # weights/biases stay resident
        for p in prepared_params
    ]
    out_specs = pl.BlockSpec((TB, P), lambda i: (i, 0))   # true-width output tile

    # Advisory cost estimate (padded weight shapes, true output width).
    d1p = prepared_params[0].shape[1]
    flops = 2 * (2 * Bp * E * d1p)                   # two split-weight layer-0 dots
    idx = 3
    for _ in range(1, num_layers):
        w = prepared_params[idx]
        flops += 2 * Bp * w.shape[0] * w.shape[1]
        idx += 2
    param_bytes = sum(int(p.size) * jnp.dtype(p.dtype).itemsize
                      for p in prepared_params)
    bytes_accessed = (2 * Bp * E * 4 + param_bytes
                      + Bp * P * jnp.dtype(out_dtype).itemsize)
    cost = pl.CostEstimate(flops=int(flops),
                           transcendentals=int(Bp * P),
                           bytes_accessed=int(bytes_accessed))

    out = pl.pallas_call(
        kernel,
        out_shape=jax.ShapeDtypeStruct((Bp, P), out_dtype),
        grid_spec=pltpu.PrefetchScalarGridSpec(
            num_scalar_prefetch=0,
            grid=(grid_b,),
            in_specs=in_specs,
            out_specs=out_specs,
        ),
        compiler_params=pltpu.CompilerParams(
            dimension_semantics=("parallel",),
            vmem_limit_bytes=32 * 1024 * 1024,
        ),
        cost_estimate=cost,
    )(embedding1, embedding2, *prepared_params)

    return out if Bp == B else out[:B]


if __name__ == "__main__":
    embedding_dim = 32
    quantum_param_count = 12
    hidden_dims = [64, 32]
    batch = 8

    key = jax.random.PRNGKey(0)
    k1, k2, kp = jax.random.split(key, 3)
    embedding1 = jax.random.normal(k1, (batch, embedding_dim), jnp.float32)
    embedding2 = jax.random.normal(k2, (batch, embedding_dim), jnp.float32)

    raw_params = init_raw_params(kp, embedding_dim, quantum_param_count, hidden_dims)
    # f32 params (mxu_dtype=None) so the 1e-4 correctness check holds.
    prepared = prepare_params(raw_params, embedding_dim)

    out = classical_mlp_forward(embedding1, embedding2, prepared,
                                quantum_param_count)
    out = jax.block_until_ready(out)

    # Pure-JAX reference (same math, Dropout(0.1) = identity, unpadded params).
    x = jnp.concatenate([embedding1, embedding2], axis=-1)
    h = x
    for i, (w, b) in enumerate(raw_params):
        h = h @ w + b
        if i < len(raw_params) - 1:
            h = jnp.maximum(h, 0.0)
    ref = jnp.tanh(h) * math.pi

    assert out.shape == (batch, quantum_param_count)
    assert jnp.max(jnp.abs(out - ref)) < 1e-4

    print("KERNEL_OK")
</pallas_src>

<mosaic_0001>
module attributes {stable_mosaic.version = 11 : i64} {
  func.func @kernel(%arg0: i32, %arg1: memref<8x32xf32, #tpu.memory_space<vmem>>, %arg2: memref<8x32xf32, #tpu.memory_space<vmem>>, %arg3: memref<32x128xf32, #tpu.memory_space<vmem>>, %arg4: memref<32x128xf32, #tpu.memory_space<vmem>>, %arg5: memref<1x128xf32, #tpu.memory_space<vmem>>, %arg6: memref<128x128xf32, #tpu.memory_space<vmem>>, %arg7: memref<1x128xf32, #tpu.memory_space<vmem>>, %arg8: memref<128x12xf32, #tpu.memory_space<vmem>>, %arg9: memref<1x12xf32, #tpu.memory_space<vmem>>, %arg10: memref<8x12xf32, #tpu.memory_space<vmem>>) attributes {dimension_semantics = [#tpu.dimension_semantics<parallel>], iteration_bounds = array<i64: 1>, scalar_prefetch = 0 : i64, scratch_operands = 0 : i64, tpu.core_type = #tpu.core_type<tc>, window_params = [{transform_indices = @transform_0, window_bounds = array<i64: 8, 32>}, {transform_indices = @transform_1, window_bounds = array<i64: 8, 32>}, {pipeline_mode = #tpu.pipeline_mode<synchronous>, transform_indices = @transform_2, window_bounds = array<i64: 32, 128>}, {pipeline_mode = #tpu.pipeline_mode<synchronous>, transform_indices = @transform_3, window_bounds = array<i64: 32, 128>}, {pipeline_mode = #tpu.pipeline_mode<synchronous>, transform_indices = @transform_4, window_bounds = array<i64: 1, 128>}, {pipeline_mode = #tpu.pipeline_mode<synchronous>, transform_indices = @transform_5, window_bounds = array<i64: 128, 128>}, {pipeline_mode = #tpu.pipeline_mode<synchronous>, transform_indices = @transform_6, window_bounds = array<i64: 1, 128>}, {pipeline_mode = #tpu.pipeline_mode<synchronous>, transform_indices = @transform_7, window_bounds = array<i64: 128, 12>}, {pipeline_mode = #tpu.pipeline_mode<synchronous>, transform_indices = @transform_8, window_bounds = array<i64: 1, 12>}, {transform_indices = @transform_9, window_bounds = array<i64: 8, 12>}]} {
    %c0 = arith.constant 0 : index
    %c0_0 = arith.constant 0 : index
    %0 = vector.load %arg1[%c0, %c0_0] : memref<8x32xf32, #tpu.memory_space<vmem>>, vector<8x32xf32>
    %c0_1 = arith.constant 0 : index
    %c0_2 = arith.constant 0 : index
    %1 = vector.load %arg2[%c0_1, %c0_2] : memref<8x32xf32, #tpu.memory_space<vmem>>, vector<8x32xf32>
    %c0_3 = arith.constant 0 : index
    %c0_4 = arith.constant 0 : index
    %2 = vector.load %arg3[%c0_3, %c0_4] : memref<32x128xf32, #tpu.memory_space<vmem>>, vector<32x128xf32>
    %c0_5 = arith.constant 0 : index
    %c0_6 = arith.constant 0 : index
    %3 = vector.load %arg4[%c0_5, %c0_6] : memref<32x128xf32, #tpu.memory_space<vmem>>, vector<32x128xf32>
    %c0_7 = arith.constant 0 : index
    %c0_8 = arith.constant 0 : index
    %4 = vector.load %arg5[%c0_7, %c0_8] : memref<1x128xf32, #tpu.memory_space<vmem>>, vector<1x128xf32>
    %cst = arith.constant dense<0.000000e+00> : vector<8x128xf32>
    %5 = tpu.matmul %0, %2, %cst {dimension_numbers = #tpu.dot_dimension_numbers<[1], [0], [0], [1], [0, 0, 1, 1], [], []>} : vector<8x32xf32>, vector<32x128xf32>, vector<8x128xf32> -> vector<8x128xf32>
    %cst_9 = arith.constant dense<0.000000e+00> : vector<8x128xf32>
    %6 = tpu.matmul %1, %3, %cst_9 {dimension_numbers = #tpu.dot_dimension_numbers<[1], [0], [0], [1], [0, 0, 1, 1], [], []>} : vector<8x32xf32>, vector<32x128xf32>, vector<8x128xf32> -> vector<8x128xf32>
    %7 = arith.addf %5, %6 : vector<8x128xf32>
    %8 = vector.broadcast %4 : vector<1x128xf32> to vector<8x128xf32>
    %9 = arith.addf %7, %8 : vector<8x128xf32>
    %cst_10 = arith.constant 0.000000e+00 : f32
    %10 = vector.broadcast %cst_10 : f32 to vector<8x128xf32>
    %11 = arith.maximumf %9, %10 : vector<8x128xf32>
    %c0_11 = arith.constant 0 : index
    %c0_12 = arith.constant 0 : index
    %12 = vector.load %arg6[%c0_11, %c0_12] : memref<128x128xf32, #tpu.memory_space<vmem>>, vector<128x128xf32>
    %c0_13 = arith.constant 0 : index
    %c0_14 = arith.constant 0 : index
    %13 = vector.load %arg7[%c0_13, %c0_14] : memref<1x128xf32, #tpu.memory_space<vmem>>, vector<1x128xf32>
    %cst_15 = arith.constant dense<0.000000e+00> : vector<8x128xf32>
    %14 = tpu.matmul %11, %12, %cst_15 {dimension_numbers = #tpu.dot_dimension_numbers<[1], [0], [0], [1], [0, 0, 1, 1], [], []>} : vector<8x128xf32>, vector<128x128xf32>, vector<8x128xf32> -> vector<8x128xf32>
    %15 = vector.broadcast %13 : vector<1x128xf32> to vector<8x128xf32>
    %16 = arith.addf %14, %15 : vector<8x128xf32>
    %cst_16 = arith.constant 0.000000e+00 : f32
    %17 = vector.broadcast %cst_16 : f32 to vector<8x128xf32>
    %18 = arith.maximumf %16, %17 : vector<8x128xf32>
    %c0_17 = arith.constant 0 : index
    %c0_18 = arith.constant 0 : index
    %19 = vector.load %arg8[%c0_17, %c0_18] : memref<128x12xf32, #tpu.memory_space<vmem>>, vector<128x12xf32>
    %c0_19 = arith.constant 0 : index
    %c0_20 = arith.constant 0 : index
    %20 = vector.load %arg9[%c0_19, %c0_20] : memref<1x12xf32, #tpu.memory_space<vmem>>, vector<1x12xf32>
    %cst_21 = arith.constant dense<0.000000e+00> : vector<8x12xf32>
    %21 = tpu.matmul %18, %19, %cst_21 {dimension_numbers = #tpu.dot_dimension_numbers<[1], [0], [0], [1], [0, 0, 1, 1], [], []>} : vector<8x128xf32>, vector<128x12xf32>, vector<8x12xf32> -> vector<8x12xf32>
    %22 = vector.broadcast %20 : vector<1x12xf32> to vector<8x12xf32>
    %23 = arith.addf %21, %22 : vector<8x12xf32>
    %24 = math.tanh %23 : vector<8x12xf32>
    %cst_22 = arith.constant 3.14159274 : f32
    %25 = vector.broadcast %cst_22 : f32 to vector<8x12xf32>
    %26 = arith.mulf %24, %25 : vector<8x12xf32>
    %c0_23 = arith.constant 0 : index
    %c0_24 = arith.constant 0 : index
    %27 = vector.load %arg10[%c0_23, %c0_24] : memref<8x12xf32, #tpu.memory_space<vmem>>, vector<8x12xf32>
    tpu.vector_store %arg10[%c0_23, %c0_24], %26 {strides = array<i32>} : memref<8x12xf32, #tpu.memory_space<vmem>>, vector<8x12xf32>,
    return
  }
  func.func @transform_0(%arg0: i32) -> (i32, i32) {
    %c0_i32 = arith.constant 0 : i32
    %c0_i32_0 = arith.constant 0 : i32
    return %arg0, %c0_i32 : i32, i32
  }
  func.func @transform_1(%arg0: i32) -> (i32, i32) {
    %c0_i32 = arith.constant 0 : i32
    %c0_i32_0 = arith.constant 0 : i32
    return %arg0, %c0_i32 : i32, i32
  }
  func.func @transform_2(%arg0: i32) -> (i32, i32) {
    %c0_i32 = arith.constant 0 : i32
    %c0_i32_0 = arith.constant 0 : i32
    %c0_i32_1 = arith.constant 0 : i32
    return %c0_i32, %c0_i32_0 : i32, i32
  }
  func.func @transform_3(%arg0: i32) -> (i32, i32) {
    %c0_i32 = arith.constant 0 : i32
    %c0_i32_0 = arith.constant 0 : i32
    %c0_i32_1 = arith.constant 0 : i32
    return %c0_i32, %c0_i32_0 : i32, i32
  }
  func.func @transform_4(%arg0: i32) -> (i32, i32) {
    %c0_i32 = arith.constant 0 : i32
    %c0_i32_0 = arith.constant 0 : i32
    %c0_i32_1 = arith.constant 0 : i32
    return %c0_i32, %c0_i32_0 : i32, i32
  }
  func.func @transform_5(%arg0: i32) -> (i32, i32) {
    %c0_i32 = arith.constant 0 : i32
    %c0_i32_0 = arith.constant 0 : i32
    %c0_i32_1 = arith.constant 0 : i32
    return %c0_i32, %c0_i32_0 : i32, i32
  }
  func.func @transform_6(%arg0: i32) -> (i32, i32) {
    %c0_i32 = arith.constant 0 : i32
    %c0_i32_0 = arith.constant 0 : i32
    %c0_i32_1 = arith.constant 0 : i32
    return %c0_i32, %c0_i32_0 : i32, i32
  }
  func.func @transform_7(%arg0: i32) -> (i32, i32) {
    %c0_i32 = arith.constant 0 : i32
    %c0_i32_0 = arith.constant 0 : i32
    %c0_i32_1 = arith.constant 0 : i32
    return %c0_i32, %c0_i32_0 : i32, i32
  }
  func.func @transform_8(%arg0: i32) -> (i32, i32) {
    %c0_i32 = arith.constant 0 : i32
    %c0_i32_0 = arith.constant 0 : i32
    %c0_i32_1 = arith.constant 0 : i32
    return %c0_i32, %c0_i32_0 : i32, i32
  }
  func.func @transform_9(%arg0: i32) -> (i32, i32) {
    %c0_i32 = arith.constant 0 : i32
    %c0_i32_0 = arith.constant 0 : i32
    return %arg0, %c0_i32 : i32, i32
  }
}

</mosaic_0001>

<llo_original>
// kernel: tpu_custom_call.1
$region0: #{tpu_custom_call.1}
  #allocation0 [shape = 'u32[]', space=smem, size = 0x4, offset = 0x4, fixed_abs, tag = 'smem constant byte address 0x4 - core index']
  #allocation1 [shape = 'u32[72,128]{1,0:T(1,128)}', space=vmem, size = 0x9000, scoped, tag = 'internal scratch']
  %s0 = inlined_call_operand.vmem [shape: f32[8,32], index: 0, kind: input, shape index: {}]
  %s1 = inlined_call_operand.vmem [shape: f32[8,32], index: 1, kind: input, shape index: {}]
  %s2 = inlined_call_operand.hbm [shape: f32[32,128], index: 2, kind: input, shape index: {}]
  %s3 = inlined_call_operand.hbm [shape: f32[32,128], index: 3, kind: input, shape index: {}]
  %s4 = inlined_call_operand.vmem [shape: f32[1,128], index: 4, kind: input, shape index: {}]
  %s5 = inlined_call_operand.vmem [shape: f32[128,128], index: 5, kind: input, shape index: {}]
  %s6 = inlined_call_operand.vmem [shape: f32[1,128], index: 6, kind: input, shape index: {}]
  %s7 = inlined_call_operand.vmem [shape: f32[128,12], index: 7, kind: input, shape index: {}]
  %s8 = inlined_call_operand.vmem [shape: f32[1,12], index: 8, kind: input, shape index: {}]
  %s9 = inlined_call_operand.hbm [shape: f32[8,12], index: 9, kind: output, shape index: {}]
  %s10 = sld [smem:[#allocation0]]
  $region54: #{tpu_custom_call.1} parent=0
    _
  %s12 = ssub.s32 1, %s10
  %s13 = scalar_select 0, %s12, %s10
  $region1: #{tpu_custom_call.1} parent=0
    #allocation2 [shape = 'u8[16384]{0}', space=vmem, size = 0x4000, scoped, tag = 'input window, operand 2, single buffered']
    #allocation3 [shape = 's32[1]{0}', space=sflag, size = 0x4, scoped, tag = 'scoped memory for tpu_custom_call.1']
    #allocation4 [shape = 's32[1]{0}', space=sflag, size = 0x4, scoped, tag = 'scoped memory for tpu_custom_call.1']
    #allocation5 [shape = 'u8[16384]{0}', space=vmem, size = 0x4000, scoped, tag = 'input window, operand 3, single buffered']
    #allocation6 [shape = 's32[1]{0}', space=sflag, size = 0x4, scoped, tag = 'scoped memory for tpu_custom_call.1']
    #allocation7 [shape = 'u8[4096]{0}', space=vmem, size = 0x1000, scoped, tag = 'output window, operand 0, single buffered']
    %14 = vsyncpa [#allocation3], 0
    %15 = vsyncpa [#allocation6], 0
    %16 = vsyncpa [#allocation4], 0
    // Predicated region
    $region2: #{tpu_custom_call.1} parent=1 // pred_check
      _
    $region3: #{tpu_custom_call.1} parent=1 // pred_check_branch
      %18 = sbr.rel (0) target = $region5
    $region4: #{tpu_custom_call.1} parent=1 // pred_region
      _
    $region5: #{tpu_custom_call.1} parent=1 // pred_fallthru
      _
    // Predicated region
    $region6: #{tpu_custom_call.1} parent=1 // pred_check
      _
    $region7: #{tpu_custom_call.1} parent=1 // pred_check_branch
      %20 = sbr.rel (0) target = $region9
    $region8: #{tpu_custom_call.1} parent=1 // pred_region
      _
    $region9: #{tpu_custom_call.1} parent=1 // pred_fallthru
      _
    // Predicated region
    $region10: #{tpu_custom_call.1} parent=1 // pred_check
      _
    $region11: #{tpu_custom_call.1} parent=1 // pred_check_branch
      %22 = sbr.rel (0) target = $region13
    $region12: #{tpu_custom_call.1} parent=1 // pred_region
      %24 = vsyncadd [#allocation3], 0
      %s25 = sshll.u32 %s2, 4
      %s26 = int_to_ptr.hbm [resolvable:$true] %s25
      %s27 = sshll.u32 [#allocation2], 4
      %s28 = int_to_ptr.vmem [resolvable:$true] %s27
      %33 = dma.hbm_to_vmem [thread:$0]  %s26, 512, %s28, [#allocation3], 128, 128, 8
    $region13: #{tpu_custom_call.1} parent=1 // pred_fallthru
      _
    // Predicated region
    $region14: #{tpu_custom_call.1} parent=1 // pred_check
      _
    $region15: #{tpu_custom_call.1} parent=1 // pred_check_branch
      %35 = sbr.rel (0) target = $region17
    $region16: #{tpu_custom_call.1} parent=1 // pred_region
      %37 = vsyncadd [#allocation6], 0
      %s38 = sshll.u32 %s3, 4
      %s39 = int_to_ptr.hbm [resolvable:$true] %s38
      %s40 = sshll.u32 [#allocation5], 4
      %s41 = int_to_ptr.vmem [resolvable:$true] %s40
      %46 = dma.hbm_to_vmem [thread:$0]  %s39, 512, %s41, [#allocation6], 128, 128, 8
    $region17: #{tpu_custom_call.1} parent=1 // pred_fallthru
      _
    // Predicated region
    $region18: #{tpu_custom_call.1} parent=1 // pred_check
      _
    $region19: #{tpu_custom_call.1} parent=1 // pred_check_branch
      %48 = sbr.rel (0) target = $region21
    $region20: #{tpu_custom_call.1} parent=1 // pred_region
      _
    $region21: #{tpu_custom_call.1} parent=1 // pred_fallthru
      _
    // Predicated region
    $region22: #{tpu_custom_call.1} parent=1 // pred_check
      _
    $region23: #{tpu_custom_call.1} parent=1 // pred_check_branch
      %50 = sbr.rel (0) target = $region25
    $region24: #{tpu_custom_call.1} parent=1 // pred_region
      _
    $region25: #{tpu_custom_call.1} parent=1 // pred_fallthru
      _
    // Predicated region
    $region26: #{tpu_custom_call.1} parent=1 // pred_check
      _
    $region27: #{tpu_custom_call.1} parent=1 // pred_check_branch
      %52 = sbr.rel (0) target = $region29
    $region28: #{tpu_custom_call.1} parent=1 // pred_region
      _
    $region29: #{tpu_custom_call.1} parent=1 // pred_fallthru
      _
    // Predicated region
    $region30: #{tpu_custom_call.1} parent=1 // pred_check
      _
    $region31: #{tpu_custom_call.1} parent=1 // pred_check_branch
      %54 = sbr.rel (0) target = $region33
    $region32: #{tpu_custom_call.1} parent=1 // pred_region
      _
    $region33: #{tpu_custom_call.1} parent=1 // pred_fallthru
      _
    // Predicated region
    $region34: #{tpu_custom_call.1} parent=1 // pred_check
      _
    $region35: #{tpu_custom_call.1} parent=1 // pred_check_branch
      %56 = sbr.rel (0) target = $region37
    $region36: #{tpu_custom_call.1} parent=1 // pred_region
      _
    $region37: #{tpu_custom_call.1} parent=1 // pred_fallthru
      _
    // Predicated region
    $region38: #{tpu_custom_call.1} parent=1 // pred_check
      _
    $region39: #{tpu_custom_call.1} parent=1 // pred_check_branch
      %58 = sbr.rel (0) target = $region41
    $region40: #{tpu_custom_call.1} parent=1 // pred_region
      %60 = dma.done [#allocation3], 512
    $region41: #{tpu_custom_call.1} parent=1 // pred_fallthru
      _
    // Predicated region
    $region42: #{tpu_custom_call.1} parent=1 // pred_check
      _
    $region43: #{tpu_custom_call.1} parent=1 // pred_check_branch
      %62 = sbr.rel (0) target = $region45
    $region44: #{tpu_custom_call.1} parent=1 // pred_region
      %64 = dma.done [#allocation6], 512
    $region45: #{tpu_custom_call.1} parent=1 // pred_fallthru
      _
    %v65 = vld [vmem:[%s0] sm:$0xff]
    %v66 = vld [vmem:[%s1] sm:$0xff]
    %v67 = vld [vmem:[#allocation2] sm:$0xff]
    %v68 = vld [vmem:[#allocation2 + $0x8] sm:$0xff]
    %v69 = vld [vmem:[#allocation2 + $0x10] sm:$0xff]
    %v70 = vld [vmem:[#allocation2 + $0x18] sm:$0xff]
    %v71 = vld [vmem:[#allocation5] sm:$0xff]
    %v72 = vld [vmem:[#allocation5 + $0x8] sm:$0xff]
    %v73 = vld [vmem:[#allocation5 + $0x10] sm:$0xff]
    %v74 = vld [vmem:[#allocation5 + $0x18] sm:$0xff]
    %v75 = vld [vmem:[%s4] sm:$0x1]
    %vm76 = vcmask 261120
    %v78 = vsel %vm76, %v66, 0
    %80 = vmatpush.msra.mxu0 0.0
    %81 = vmatpush.msra.mxu0 0.0
    %82 = vmatpush.msra.mxu0 0.0
    %83 = vmatpush.msra.mxu0 0.0
    %84 = vmatpush.msra.mxu0 0.0
    %85 = vmatpush.msra.mxu0 0.0
    %86 = vmatpush.msra.mxu0 0.0
    %87 = vmatpush.msra.mxu0 0.0
    %88 = vmatpush.msra.mxu0 0.0
    %89 = vmatpush.msra.mxu0 0.0
    %90 = vmatpush.msra.mxu0 0.0
    %91 = vmatpush.msra.mxu0 0.0
    %92 = vmatpush.msra.mxu0 %v74
    %93 = vmatpush.msra.mxu0 %v73
    %94 = vmatpush.msra.mxu0 %v72
    %95 = vmatpush.msra.mxu0 %v71
    %96 = vmatmul.f32.gmra.mxu0 %v78
    %v97 = vpop.f32.mrf.mxu0
    %v98 = vadd.f32 0.0, %v97
    %99 = vdwg.mxu0
    %v101 = vsel %vm76, %v65, 0
    %103 = vmatpush.msra.mxu0 0.0
    %104 = vmatpush.msra.mxu0 0.0
    %105 = vmatpush.msra.mxu0 0.0
    %106 = vmatpush.msra.mxu0 0.0
    %107 = vmatpush.msra.mxu0 0.0
    %108 = vmatpush.msra.mxu0 0.0
    %109 = vmatpush.msra.mxu0 0.0
    %110 = vmatpush.msra.mxu0 0.0
    %111 = vmatpush.msra.mxu0 0.0
    %112 = vmatpush.msra.mxu0 0.0
    %113 = vmatpush.msra.mxu0 0.0
    %114 = vmatpush.msra.mxu0 0.0
    %115 = vmatpush.msra.mxu0 %v70
    %116 = vmatpush.msra.mxu0 %v69
    %117 = vmatpush.msra.mxu0 %v68
    %118 = vmatpush.msra.mxu0 %v67
    %119 = vmatmul.f32.gmra.mxu0 %v101
    %v120 = vpop.f32.mrf.mxu0
    %v121 = vadd.f32 %v98, %v120
    %122 = vdwg.mxu0
    %v124 = vperm.slane %v75, 0
    %v126 = vadd.f32 %v121, %v124
    %v127 = vmax.f32 %v126, 0.0
    %v128 = vld [vmem:[%s5] sm:$0xff]
    %v129 = vld [vmem:[%s5 + $0x8] sm:$0xff]
    %v130 = vld [vmem:[%s5 + $0x10] sm:$0xff]
    %v131 = vld [vmem:[%s5 + $0x18] sm:$0xff]
    %v132 = vld [vmem:[%s5 + $0x20] sm:$0xff]
    %v133 = vld [vmem:[%s5 + $0x28] sm:$0xff]
    %v134 = vld [vmem:[%s5 + $0x30] sm:$0xff]
    %v135 = vld [vmem:[%s5 + $0x38] sm:$0xff]
    %v136 = vld [vmem:[%s5 + $0x40] sm:$0xff]
    %v137 = vld [vmem:[%s5 + $0x48] sm:$0xff]
    %v138 = vld [vmem:[%s5 + $0x50] sm:$0xff]
    %v139 = vld [vmem:[%s5 + $0x58] sm:$0xff]
    %v140 = vld [vmem:[%s5 + $0x60] sm:$0xff]
    %v141 = vld [vmem:[%s5 + $0x68] sm:$0xff]
    %v142 = vld [vmem:[%s5 + $0x70] sm:$0xff]
    %v143 = vld [vmem:[%s5 + $0x78] sm:$0xff]
    %v144 = vld [vmem:[%s6] sm:$0x1]
    %v146 = vperm.slane %v144, 0
    %148 = vmatpush.msra.mxu0 %v143
    %149 = vmatpush.msra.mxu0 %v142
    %150 = vmatpush.msra.mxu0 %v141
    %151 = vmatpush.msra.mxu0 %v140
    %152 = vmatpush.msra.mxu0 %v139
    %153 = vmatpush.msra.mxu0 %v138
    %154 = vmatpush.msra.mxu0 %v137
    %155 = vmatpush.msra.mxu0 %v136
    %156 = vmatpush.msra.mxu0 %v135
    %157 = vmatpush.msra.mxu0 %v134
    %158 = vmatpush.msra.mxu0 %v133
    %159 = vmatpush.msra.mxu0 %v132
    %160 = vmatpush.msra.mxu0 %v131
    %161 = vmatpush.msra.mxu0 %v130
    %162 = vmatpush.msra.mxu0 %v129
    %163 = vmatpush.msra.mxu0 %v128
    %164 = vmatmul.f32.gmra.mxu0 %v127
    %v165 = vpop.f32.mrf.mxu0
    %v166 = vadd.f32 %v146, %v165
    %167 = vdwg.mxu0
    %v168 = vmax.f32 %v166, 0.0
    %v169 = vld [vmem:[%s7] sm:$0xff]
    %v170 = vld [vmem:[%s7 + $0x8] sm:$0xff]
    %v171 = vld [vmem:[%s7 + $0x10] sm:$0xff]
    %v172 = vld [vmem:[%s7 + $0x18] sm:$0xff]
    %v173 = vld [vmem:[%s7 + $0x20] sm:$0xff]
    %v174 = vld [vmem:[%s7 + $0x28] sm:$0xff]
    %v175 = vld [vmem:[%s7 + $0x30] sm:$0xff]
    %v176 = vld [vmem:[%s7 + $0x38] sm:$0xff]
    %v177 = vld [vmem:[%s7 + $0x40] sm:$0xff]
    %v178 = vld [vmem:[%s7 + $0x48] sm:$0xff]
    %v179 = vld [vmem:[%s7 + $0x50] sm:$0xff]
    %v180 = vld [vmem:[%s7 + $0x58] sm:$0xff]
    %v181 = vld [vmem:[%s7 + $0x60] sm:$0xff]
    %v182 = vld [vmem:[%s7 + $0x68] sm:$0xff]
    %v183 = vld [vmem:[%s7 + $0x70] sm:$0xff]
    %v184 = vld [vmem:[%s7 + $0x78] sm:$0xff]
    %v185 = vld [vmem:[%s8] sm:$0x1]
    %v187 = vperm.slane %v185, 0
    %189 = vmatpush.msra.mxu0 %v184
    %190 = vmatpush.msra.mxu0 %v183
    %191 = vmatpush.msra.mxu0 %v182
    %192 = vmatpush.msra.mxu0 %v181
    %193 = vmatpush.msra.mxu0 %v180
    %194 = vmatpush.msra.mxu0 %v179
    %195 = vmatpush.msra.mxu0 %v178
    %196 = vmatpush.msra.mxu0 %v177
    %197 = vmatpush.msra.mxu0 %v176
    %198 = vmatpush.msra.mxu0 %v175
    %199 = vmatpush.msra.mxu0 %v174
    %200 = vmatpush.msra.mxu0 %v173
    %201 = vmatpush.msra.mxu0 %v172
    %202 = vmatpush.msra.mxu0 %v171
    %203 = vmatpush.msra.mxu0 %v170
    %204 = vmatpush.msra.mxu0 %v169
    %205 = vmatmul.f32.gmra.mxu0 %v168
    %v206 = vpop.f32.mrf.mxu0
    %v207 = vadd.f32 %v187, %v206
    %208 = vdwg.mxu0
    %v209 = vtanh.pop %v207
    %v210 = vmul.f32 %v209, 3.1415927
    %vm211 = vcmask 97280
    %212 = vst.msk [vmem:[#allocation7] sm:$0xff] %vm211, %v210
    // Predicated region
    $region46: #{tpu_custom_call.1} parent=1 // pred_check
      _
    $region47: #{tpu_custom_call.1} parent=1 // pred_check_branch
      %214 = sbr.rel (0) target = $region49
    $region48: #{tpu_custom_call.1} parent=1 // pred_region
      %216 = vsyncadd [#allocation4], 0
      %s218 = sshll.u32 [#allocation7], 4
      %s219 = int_to_ptr.vmem [resolvable:$true] %s218
      %s220 = sshll.u32 %s9, 4
      %s221 = int_to_ptr.hbm [resolvable:$true] %s220
      %223 = dma.vmem_to_hbm [thread:$0]  %s219, 128, %s221, [#allocation4]
    $region49: #{tpu_custom_call.1} parent=1 // pred_fallthru
      _
    // Predicated region
    $region50: #{tpu_custom_call.1} parent=1 // pred_check
      _
    $region51: #{tpu_custom_call.1} parent=1 // pred_check_branch
      %225 = sbr.rel (0) target = $region53
    $region52: #{tpu_custom_call.1} parent=1 // pred_region
      %227 = dma.done [#allocation4], 128
    $region53: #{tpu_custom_call.1} parent=1 // pred_fallthru
      _
    %228 = vsyncpa [#allocation3], 1
    %229 = vsyncpa [#allocation6], 1
    %230 = vsyncpa [#allocation4], 1

</llo_original>
